<compile_context>
chip_gen: v5e
topology: v5e:2x2
jax: 0.10.0
libtpu: 0.0.40
codegen_flags: <defaults>
</compile_context>

<pallas_src>
import jax
import jax.numpy as jnp
from jax.experimental import pallas as pl
from jax.experimental.pallas import tpu as pltpu


def _decoder_kernel(x_ref, w_ref, b_ref, o_ref):
    # x_ref: (TILE_N, C, HW) native dtype
    # w_ref: (C, PAD) f32 (pre-scaled by 1/HW)   b_ref: (1, PAD) f32
    # o_ref: (TILE_N, PAD) f32
    pooled = jnp.sum(x_ref[...], axis=2, dtype=jnp.float32)      # (TILE_N, C), f32 accum
    out = jnp.dot(pooled, w_ref[...],
                  preferred_element_type=jnp.float32)            # (TILE_N, PAD) on MXU
    o_ref[...] = out + b_ref[...]                                # bias broadcast


def _pick_tile_n(n, c, hw, itemsize, target_bytes=8 << 20):
    """Batch tile sized so one streamed input tile is ~target_bytes.

    - rounded down to a multiple of 8 (legal (8,128) output block) unless it
      covers the whole batch,
    - capped at ceil(N/2) when N >= 16 so the 'parallel' grid axis has >= 2
      steps (lets v7x's second TensorCore take half the batch).
    """
    per_row = max(c * hw * itemsize, 1)
    t = target_bytes // per_row
    if n >= 16:
        t = min(t, pl.cdiv(n, 2))
    t = int(max(1, min(t, n)))
    if t < n:
        t = max(8, (t // 8) * 8)
        t = min(t, n)
    return t


def resnet_decoder(x_nchw, weight, bias):
    """x_nchw: (N, C, H, W); weight: (n_classes, C) (PyTorch layout); bias: (n_classes,)."""
    N, C, H, W = x_nchw.shape
    HW = H * W
    n_classes = weight.shape[0]
    PAD = pl.cdiv(n_classes, 128) * 128          # lane-dense output width

    # Free reshape: HW is already contiguous in NCHW. No extra HBM round-trip.
    x_nchw_flat = x_nchw.reshape(N, C, HW)

    # Fold the mean scale into the transposed weight; zero-pad classes to PAD.
    w_t = weight.T.astype(jnp.float32) * (1.0 / HW)                       # (C, n_classes)
    w_pad = jnp.zeros((C, PAD), jnp.float32).at[:, :n_classes].set(w_t)
    b_pad = jnp.zeros((1, PAD), jnp.float32).at[0, :n_classes].set(
        bias.astype(jnp.float32))

    itemsize = jnp.dtype(x_nchw_flat.dtype).itemsize
    TILE_N = _pick_tile_n(N, C, HW, itemsize)
    grid = (pl.cdiv(N, TILE_N),)

    cost = pl.CostEstimate(
        flops=2 * N * C * n_classes + N * C * HW,
        transcendentals=0,
        bytes_accessed=N * C * HW * itemsize + C * PAD * 4 + N * PAD * 4 + PAD * 4,
    )

    out_pad = pl.pallas_call(
        _decoder_kernel,
        out_shape=jax.ShapeDtypeStruct((N, PAD), jnp.float32),
        grid=grid,
        in_specs=[
            pl.BlockSpec((TILE_N, C, HW), lambda i: (i, 0, 0)),   # streamed, pipelined
            pl.BlockSpec((C, PAD), lambda i: (0, 0)),             # weight: VMEM-resident
            pl.BlockSpec((1, PAD), lambda i: (0, 0)),             # bias:   VMEM-resident
        ],
        out_specs=pl.BlockSpec((TILE_N, PAD), lambda i: (i, 0)),
        compiler_params=pltpu.CompilerParams(
            dimension_semantics=("parallel",),     # shards batch across v7x's 2 TCs
            vmem_limit_bytes=48 * 1024 * 1024,     # safe on v7x (64 MiB phys), ample on v5e/v6e
        ),
        cost_estimate=cost,
    )(x_nchw_flat, w_pad, b_pad)

    return out_pad[:, :n_classes]


if __name__ == "__main__":
    # ResnetDecoder(in_features=4, n_classes=10) on input (2, 4, 16, 16)
    N, C, H, W = 2, 4, 16, 16
    n_classes = 10

    key = jax.random.PRNGKey(0)
    kx, kw, kb = jax.random.split(key, 3)

    x = jax.random.normal(kx, (N, C, H, W), dtype=jnp.float32)

    # Deterministic "PyTorch-like" Linear init: U(-1/sqrt(in_features), 1/sqrt(in_features))
    bound = 1.0 / (C ** 0.5)
    weight = jax.random.uniform(kw, (n_classes, C), minval=-bound, maxval=bound,
                                dtype=jnp.float32)
    bias = jax.random.uniform(kb, (n_classes,), minval=-bound, maxval=bound,
                              dtype=jnp.float32)

    out = resnet_decoder(x, weight, bias)
    out = jax.block_until_ready(out)

    # Pure-JAX reference check (mean-pool then Linear)
    ref = jnp.mean(x, axis=(2, 3)) @ weight.T + bias
    assert out.shape == (N, n_classes)
    assert jnp.allclose(out, ref, atol=1e-5, rtol=1e-5), "mismatch vs reference"

    print("KERNEL_OK")
</pallas_src>

<mosaic_0001>
module attributes {stable_mosaic.version = 11 : i64} {
  func.func @_decoder_kernel(%arg0: i32, %arg1: memref<2x4x256xf32, #tpu.memory_space<vmem>>, %arg2: memref<4x128xf32, #tpu.memory_space<vmem>>, %arg3: memref<1x128xf32, #tpu.memory_space<vmem>>, %arg4: memref<2x128xf32, #tpu.memory_space<vmem>>) attributes {dimension_semantics = [#tpu.dimension_semantics<parallel>], iteration_bounds = array<i64: 1>, scalar_prefetch = 0 : i64, scratch_operands = 0 : i64, tpu.core_type = #tpu.core_type<tc>, window_params = [{transform_indices = @transform_0, window_bounds = array<i64: 2, 4, 256>}, {pipeline_mode = #tpu.pipeline_mode<synchronous>, transform_indices = @transform_1, window_bounds = array<i64: 4, 128>}, {pipeline_mode = #tpu.pipeline_mode<synchronous>, transform_indices = @transform_2, window_bounds = array<i64: 1, 128>}, {transform_indices = @transform_3, window_bounds = array<i64: 2, 128>}]} {
    %c0 = arith.constant 0 : index
    %c0_0 = arith.constant 0 : index
    %c0_1 = arith.constant 0 : index
    %0 = vector.load %arg1[%c0, %c0_0, %c0_1] : memref<2x4x256xf32, #tpu.memory_space<vmem>>, vector<2x4x256xf32>
    %cst = arith.constant dense<0.000000e+00> : vector<2x4xf32>
    %1 = vector.multi_reduction <add>, %0, %cst [2] : vector<2x4x256xf32> to vector<2x4xf32>
    %c0_2 = arith.constant 0 : index
    %c0_3 = arith.constant 0 : index
    %2 = vector.load %arg2[%c0_2, %c0_3] : memref<4x128xf32, #tpu.memory_space<vmem>>, vector<4x128xf32>
    %cst_4 = arith.constant dense<0.000000e+00> : vector<2x128xf32>
    %3 = tpu.matmul %1, %2, %cst_4 {dimension_numbers = #tpu.dot_dimension_numbers<[1], [0], [0], [1], [0, 0, 1, 1], [], []>} : vector<2x4xf32>, vector<4x128xf32>, vector<2x128xf32> -> vector<2x128xf32>
    %c0_5 = arith.constant 0 : index
    %c0_6 = arith.constant 0 : index
    %4 = vector.load %arg3[%c0_5, %c0_6] : memref<1x128xf32, #tpu.memory_space<vmem>>, vector<1x128xf32>
    %5 = vector.broadcast %4 : vector<1x128xf32> to vector<2x128xf32>
    %6 = arith.addf %3, %5 : vector<2x128xf32>
    %c0_7 = arith.constant 0 : index
    %c0_8 = arith.constant 0 : index
    %7 = vector.load %arg4[%c0_7, %c0_8] : memref<2x128xf32, #tpu.memory_space<vmem>>, vector<2x128xf32>
    tpu.vector_store %arg4[%c0_7, %c0_8], %6 {strides = array<i32>} : memref<2x128xf32, #tpu.memory_space<vmem>>, vector<2x128xf32>,
    return
  }
  func.func @transform_0(%arg0: i32) -> (i32, i32, i32) {
    %c0_i32 = arith.constant 0 : i32
    %c0_i32_0 = arith.constant 0 : i32
    %c0_i32_1 = arith.constant 0 : i32
    return %arg0, %c0_i32, %c0_i32_0 : i32, i32, i32
  }
  func.func @transform_1(%arg0: i32) -> (i32, i32) {
    %c0_i32 = arith.constant 0 : i32
    %c0_i32_0 = arith.constant 0 : i32
    %c0_i32_1 = arith.constant 0 : i32
    return %c0_i32, %c0_i32_0 : i32, i32
  }
  func.func @transform_2(%arg0: i32) -> (i32, i32) {
    %c0_i32 = arith.constant 0 : i32
    %c0_i32_0 = arith.constant 0 : i32
    %c0_i32_1 = arith.constant 0 : i32
    return %c0_i32, %c0_i32_0 : i32, i32
  }
  func.func @transform_3(%arg0: i32) -> (i32, i32) {
    %c0_i32 = arith.constant 0 : i32
    %c0_i32_0 = arith.constant 0 : i32
    return %arg0, %c0_i32 : i32, i32
  }
}

</mosaic_0001>

<llo_original>
// kernel: tpu_custom_call.1
$region0: #{tpu_custom_call.1}
  #allocation0 [shape = 'u32[]', space=smem, size = 0x4, offset = 0x4, fixed_abs, tag = 'smem constant byte address 0x4 - core index']
  #allocation1 [shape = 'u32[72,128]{1,0:T(1,128)}', space=vmem, size = 0x9000, scoped, tag = 'internal scratch']
  %s0 = inlined_call_operand.hbm [shape: f32[2,4,256], index: 0, kind: input, shape index: {}]
  %s1 = inlined_call_operand.hbm [shape: f32[4,128], index: 1, kind: input, shape index: {}]
  %s2 = inlined_call_operand.vmem [shape: f32[1,128], index: 2, kind: input, shape index: {}]
  %s3 = inlined_call_operand.hbm [shape: f32[2,128], index: 3, kind: output, shape index: {}]
  %s4 = sld [smem:[#allocation0]]
  $region30: #{tpu_custom_call.1} parent=0
    _
  %s6 = ssub.s32 1, %s4
  %s7 = scalar_select 0, %s6, %s4
  $region1: #{tpu_custom_call.1} parent=0
    #allocation2 [shape = 'u8[8192]{0}', space=vmem, size = 0x2000, scoped, tag = 'input window, operand 0, single buffered']
    #allocation3 [shape = 's32[1]{0}', space=sflag, size = 0x4, scoped, tag = 'scoped memory for tpu_custom_call.1']
    #allocation4 [shape = 's32[1]{0}', space=sflag, size = 0x4, scoped, tag = 'scoped memory for tpu_custom_call.1']
    #allocation5 [shape = 'u8[2048]{0}', space=vmem, size = 0x800, scoped, tag = 'input window, operand 1, single buffered']
    #allocation6 [shape = 's32[1]{0}', space=sflag, size = 0x4, scoped, tag = 'scoped memory for tpu_custom_call.1']
    #allocation7 [shape = 'u8[1024]{0}', space=vmem, size = 0x400, scoped, tag = 'output window, operand 0, single buffered']
    %8 = vsyncpa [#allocation3], 0
    %9 = vsyncpa [#allocation6], 0
    %10 = vsyncpa [#allocation4], 0
    // Predicated region
    $region2: #{tpu_custom_call.1} parent=1 // pred_check
      _
    $region3: #{tpu_custom_call.1} parent=1 // pred_check_branch
      %12 = sbr.rel (0) target = $region5
    $region4: #{tpu_custom_call.1} parent=1 // pred_region
      %14 = vsyncadd [#allocation3], 0
      %s15 = sshll.u32 %s0, 4
      %s16 = int_to_ptr.hbm [resolvable:$true] %s15
      %s17 = sshll.u32 [#allocation2], 4
      %s18 = int_to_ptr.vmem [resolvable:$true] %s17
      %23 = dma.hbm_to_vmem [thread:$0]  %s16, 256, %s18, [#allocation3], 128, 128, 8
    $region5: #{tpu_custom_call.1} parent=1 // pred_fallthru
      _
    // Predicated region
    $region6: #{tpu_custom_call.1} parent=1 // pred_check
      _
    $region7: #{tpu_custom_call.1} parent=1 // pred_check_branch
      %25 = sbr.rel (0) target = $region9
    $region8: #{tpu_custom_call.1} parent=1 // pred_region
      %27 = vsyncadd [#allocation6], 0
      %s29 = sshll.u32 %s1, 4
      %s30 = int_to_ptr.hbm [resolvable:$true] %s29
      %s31 = sshll.u32 [#allocation5], 4
      %s32 = int_to_ptr.vmem [resolvable:$true] %s31
      %34 = dma.hbm_to_vmem [thread:$0]  %s30, 64, %s32, [#allocation6]
    $region9: #{tpu_custom_call.1} parent=1 // pred_fallthru
      _
    // Predicated region
    $region10: #{tpu_custom_call.1} parent=1 // pred_check
      _
    $region11: #{tpu_custom_call.1} parent=1 // pred_check_branch
      %36 = sbr.rel (0) target = $region13
    $region12: #{tpu_custom_call.1} parent=1 // pred_region
      _
    $region13: #{tpu_custom_call.1} parent=1 // pred_fallthru
      _
    // Predicated region
    $region14: #{tpu_custom_call.1} parent=1 // pred_check
      _
    $region15: #{tpu_custom_call.1} parent=1 // pred_check_branch
      %38 = sbr.rel (0) target = $region17
    $region16: #{tpu_custom_call.1} parent=1 // pred_region
      %40 = dma.done [#allocation3], 256
    $region17: #{tpu_custom_call.1} parent=1 // pred_fallthru
      _
    // Predicated region
    $region18: #{tpu_custom_call.1} parent=1 // pred_check
      _
    $region19: #{tpu_custom_call.1} parent=1 // pred_check_branch
      %42 = sbr.rel (0) target = $region21
    $region20: #{tpu_custom_call.1} parent=1 // pred_region
      %44 = dma.done [#allocation6], 64
    $region21: #{tpu_custom_call.1} parent=1 // pred_fallthru
      _
    %v45 = vld [vmem:[#allocation2] sm:$0xff]
    %v46 = vld [vmem:[#allocation2 + $0x8] sm:$0xff]
    %49 = vst [vmem:[#allocation1] ss:$2 sm:$0xff] %v45
    %v50 = vld.sshfl [vmem:[#allocation1] sm:$0xff pattern:$0x75316420]
    %v51 = vld.sshfl [vmem:[#allocation1 + $0x8] sm:$0xff pattern:$0x75316420]
    %s52 = scalar_lea.vmem [#allocation1], 16
    %53 = vst [vmem:[%s52] ss:$2 sm:$0xff] %v46
    %v54 = vld.sshfl [vmem:[#allocation1 + $0x10] sm:$0xff pattern:$0x75316420]
    %v55 = vld.sshfl [vmem:[#allocation1 + $0x18] sm:$0xff pattern:$0x75316420]
    %vm60 = vcmask 1043456
    %v61 = vsel %vm60, %v50, 0.0
    %v62 = vsel %vm60, %v51, 0.0
    %v63 = vadd.f32 %v61, %v62
    %64 = vadd.xlane.f32.xlu0 %v63
    %v65 = vpop.xlane.xlu0 %64
    %v66 = vsel %vm60, %v54, 0.0
    %v67 = vsel %vm60, %v55, 0.0
    %v68 = vadd.f32 %v66, %v67
    %69 = vadd.xlane.f32.xlu0 %v68
    %v70 = vpop.xlane.xlu0 %69
    %v71 = vld [vmem:[#allocation5] sm:$0xf]
    %v72 = vld [vmem:[%s2] sm:$0x1]
    %v74 = vperm.slane %v72, 0
    %v78 = vlaneseq
    %v79 = vand.u32 %v78, 127
    %v80 = vperm.slane %v65, %v79
    %v81 = vperm.slane %v70, %v79
    %vm82 = vcmask 1041409
    %v83 = vsel %vm82, %v81, %v80
    %vm84 = vcmask 31744
    %v85 = vsel %vm84, %v83, 0
    %v88 = vsel %vm60, %v71, 0
    %90 = vmatpush.msra.mxu0 0.0
    %91 = vmatpush.msra.mxu0 0.0
    %92 = vmatpush.msra.mxu0 0.0
    %93 = vmatpush.msra.mxu0 0.0
    %94 = vmatpush.msra.mxu0 0.0
    %95 = vmatpush.msra.mxu0 0.0
    %96 = vmatpush.msra.mxu0 0.0
    %97 = vmatpush.msra.mxu0 0.0
    %98 = vmatpush.msra.mxu0 0.0
    %99 = vmatpush.msra.mxu0 0.0
    %100 = vmatpush.msra.mxu0 0.0
    %101 = vmatpush.msra.mxu0 0.0
    %102 = vmatpush.msra.mxu0 0.0
    %103 = vmatpush.msra.mxu0 0.0
    %104 = vmatpush.msra.mxu0 0.0
    %105 = vmatpush.msra.mxu0 %v88
    %106 = vmatmul.f32.gmra.mxu0 %v85
    %v107 = vpop.f32.mrf.mxu0
    %v108 = vadd.f32 %v74, %v107
    %109 = vdwg.mxu0
    %110 = vst [vmem:[#allocation7] sm:$0x3] %v108
    // Predicated region
    $region22: #{tpu_custom_call.1} parent=1 // pred_check
      _
    $region23: #{tpu_custom_call.1} parent=1 // pred_check_branch
      %112 = sbr.rel (0) target = $region25
    $region24: #{tpu_custom_call.1} parent=1 // pred_region
      %114 = vsyncadd [#allocation4], 0
      %s116 = sshll.u32 [#allocation7], 4
      %s117 = int_to_ptr.vmem [resolvable:$true] %s116
      %s118 = sshll.u32 %s3, 4
      %s119 = int_to_ptr.hbm [resolvable:$true] %s118
      %121 = dma.vmem_to_hbm [thread:$0]  %s117, 32, %s119, [#allocation4]
    $region25: #{tpu_custom_call.1} parent=1 // pred_fallthru
      _
    // Predicated region
    $region26: #{tpu_custom_call.1} parent=1 // pred_check
      _
    $region27: #{tpu_custom_call.1} parent=1 // pred_check_branch
      %123 = sbr.rel (0) target = $region29
    $region28: #{tpu_custom_call.1} parent=1 // pred_region
      %125 = dma.done [#allocation4], 32
    $region29: #{tpu_custom_call.1} parent=1 // pred_fallthru
      _
    %126 = vsyncpa [#allocation3], 1
    %127 = vsyncpa [#allocation6], 1
    %128 = vsyncpa [#allocation4], 1

</llo_original>
